<compile_context>
chip_gen: v5e
topology: v5e:2x2
jax: 0.10.0
libtpu: 0.0.40
codegen_flags: <defaults>
</compile_context>

<pallas_src>
import functools
import math

import jax
import jax.numpy as jnp
from jax.experimental import pallas as pl
from jax.experimental.pallas import tpu as pltpu

LN_EPS = 1e-5


def _layernorm(x, g, b, eps):
    mean = jnp.mean(x, axis=-1, keepdims=True)
    var = jnp.mean(jnp.square(x - mean), axis=-1, keepdims=True)
    return (x - mean) * jax.lax.rsqrt(var + eps) * g + b


@functools.lru_cache(maxsize=1)
def _vmem_limit_bytes():
    # v5e/v6e: 128 MiB physical VMEM, v7x: 64 MiB per TensorCore.  Use ~3/4 of
    # physical so Mosaic never silently spills the (S,3H)/(S,I) intermediates.
    try:
        phys = pltpu.get_tpu_info().vmem_capacity_bytes
    except Exception:
        phys = 64 * 1024 * 1024
    return int(min(phys * 3 // 4, 96 * 1024 * 1024))


# ----------------------------------------------------------------------------
# Embedding LayerNorm (row-tiled, parallel grid, bf16 output)
# ----------------------------------------------------------------------------
def _layernorm_kernel(x_ref, g_ref, b_ref, o_ref, *, eps):
    o_ref[...] = _layernorm(x_ref[...], g_ref[...], b_ref[...], eps).astype(o_ref.dtype)


def layernorm(x, gamma, beta, *, eps=LN_EPS, block_rows=512):
    N, D = x.shape
    tm = min(block_rows, N)
    return pl.pallas_call(
        functools.partial(_layernorm_kernel, eps=eps),
        out_shape=jax.ShapeDtypeStruct((N, D), jnp.bfloat16),
        grid=(pl.cdiv(N, tm),),
        in_specs=[
            pl.BlockSpec((tm, D), lambda i: (i, 0)),
            pl.BlockSpec((1, D), lambda i: (0, 0)),
            pl.BlockSpec((1, D), lambda i: (0, 0)),
        ],
        out_specs=pl.BlockSpec((tm, D), lambda i: (i, 0)),
        compiler_params=pltpu.CompilerParams(dimension_semantics=("parallel",)),
        cost_estimate=pl.CostEstimate(
            flops=10 * N * D, transcendentals=N,
            bytes_accessed=N * D * 4 + N * D * 2 + 2 * D * 4),
    )(x, gamma, beta)


# ----------------------------------------------------------------------------
# Fused transformer encoder layer: QKV -> MHA -> O-proj + LN -> FFN + LN
# One pallas_call per layer; grid over batch (parallel).  If q_rows is set,
# only the first q_rows query rows are computed (CLS-only last layer).
# ----------------------------------------------------------------------------
def _encoder_layer_kernel(
    hid_ref, mask_ref,
    qkv_w_ref, qkv_b_ref, o_w_ref, o_b_ref, ln1_g_ref, ln1_b_ref,
    f1_w_ref, f1_b_ref, f2_w_ref, f2_b_ref, ln2_g_ref, ln2_b_ref,
    out_ref, ctx_ref, *, num_heads, eps, q_rows, ffn_chunk):
    x = hid_ref[0]                        # (S, H) bf16, one batch element
    m = mask_ref[0]                       # (1, S) f32 additive attention mask
    S, H = x.shape
    Dh = H // num_heads
    Q = S if q_rows is None else q_rows
    scale = 1.0 / math.sqrt(Dh)

    w_qkv = qkv_w_ref[...]                # (H, 3H) bf16, VMEM-resident
    b_qkv = qkv_b_ref[...]                # (1, 3H) f32

    if Q == S:
        # fused QKV projection: single (H, 3H) MXU pass
        qkv = jnp.dot(x, w_qkv, preferred_element_type=jnp.float32) + b_qkv
        q = qkv[:, :H]
        k = qkv[:, H:2 * H]
        v = qkv[:, 2 * H:]
    else:
        # CLS-only layer: Q needs only the first Q rows, K/V the full sequence
        q = (jnp.dot(x[:Q], w_qkv[:, :H], preferred_element_type=jnp.float32)
             + b_qkv[:, :H])
        kv = jnp.dot(x, w_qkv[:, H:], preferred_element_type=jnp.float32) + b_qkv[:, H:]
        k = kv[:, :H]
        v = kv[:, H:]

    # transpose K once per layer (one XLU pass) instead of relayouts per head
    k_t = k.T.astype(jnp.bfloat16)        # (H, S)
    v_bf = v.astype(jnp.bfloat16)
    q = q * scale

    # Per-head attention.  Each head's context is stored into the (Q, H)
    # scratch so the output projection runs as ONE full-depth matmul below and
    # per-head score/prob tensors die at the end of each iteration.
    # TODO(synk): at real scale (12 heads, Dh=64) group heads into 128-lane
    # pairs / a fori_loop to further bound vreg live ranges.
    for h in range(num_heads):
        sl = slice(h * Dh, (h + 1) * Dh)
        qh = q[:, sl].astype(jnp.bfloat16)                     # (Q, Dh)
        s = jnp.dot(qh, k_t[sl, :],
                    preferred_element_type=jnp.float32) + m    # (Q, S)
        s = s - jnp.max(s, axis=-1, keepdims=True)
        p = jnp.exp(s)
        inv = 1.0 / jnp.sum(p, axis=-1, keepdims=True)         # exact, (Q, 1)
        o_h = jnp.dot(p.astype(jnp.bfloat16), v_bf[:, sl],
                      preferred_element_type=jnp.float32)      # (Q, Dh)
        ctx_ref[:, sl] = (o_h * inv).astype(ctx_ref.dtype)

    # single full-depth (Q,H)@(H,H) output projection
    attn = jnp.dot(ctx_ref[...], o_w_ref[...],
                   preferred_element_type=jnp.float32) + o_b_ref[...]
    x_res = (x[:Q] if Q != S else x).astype(jnp.float32)
    h1 = _layernorm(attn + x_res, ln1_g_ref[...], ln1_b_ref[...], eps)

    # FFN + residual + LN, chunked over rows so the (rows, I) f32 intermediate
    # stays bounded (matters at S=512, I=3072 on v7x's 64 MiB VMEM).
    f1_w = f1_w_ref[...]
    f1_b = f1_b_ref[...]
    f2_w = f2_w_ref[...]
    f2_b = f2_b_ref[...]
    ln2_g = ln2_g_ref[...]
    ln2_b = ln2_b_ref[...]
    for r0 in range(0, Q, ffn_chunk):
        r1 = min(r0 + ffn_chunk, Q)
        h1c = h1[r0:r1]
        ff = jnp.dot(h1c.astype(jnp.bfloat16), f1_w,
                     preferred_element_type=jnp.float32) + f1_b
        # TODO(synk): HF GraphCodeBERT uses exact erf-GELU; tanh approximation
        # is used here for guaranteed Mosaic lowering of the transcendental.
        ff = jax.nn.gelu(ff, approximate=True).astype(jnp.bfloat16)
        ff2 = jnp.dot(ff, f2_w, preferred_element_type=jnp.float32) + f2_b
        out_ref[0, r0:r1, :] = _layernorm(ff2 + h1c, ln2_g, ln2_b,
                                          eps).astype(out_ref.dtype)


def encoder_layer(hidden, mask_add, lp, *, num_heads, eps=LN_EPS,
                  cls_only=False, ffn_chunk=256):
    B, S, H = hidden.shape
    I = lp["f1_w"].shape[1]
    Q = 1 if cls_only else S
    ffn_chunk = max(1, min(ffn_chunk, Q))

    act_spec = pl.BlockSpec((1, S, H), lambda b: (b, 0, 0))
    mask_spec = pl.BlockSpec((1, 1, S), lambda b: (b, 0, 0))
    # whole-array VMEM operand: weights are copied to VMEM once and stay
    # resident (single-buffered), instead of being double-buffered per block.
    w_spec = pl.BlockSpec(memory_space=pltpu.MemorySpace.VMEM)

    weights = (lp["qkv_w"], lp["qkv_b"], lp["o_w"], lp["o_b"],
               lp["attn_ln_g"], lp["attn_ln_b"],
               lp["f1_w"], lp["f1_b"], lp["f2_w"], lp["f2_b"],
               lp["ffn_ln_g"], lp["ffn_ln_b"])

    flops = B * ((2 * S * H * 3 * H) if not cls_only
                 else (2 * Q * H * H + 2 * S * H * 2 * H))
    flops += B * (4 * Q * S * H + 2 * Q * H * H + 4 * Q * H * I)
    transcend = B * (num_heads * Q * S + Q * I)
    bytes_accessed = (B * S * H * 2 + B * Q * H * 2 + B * S * 4
                      + sum(int(w.size) * w.dtype.itemsize for w in weights))

    kernel = functools.partial(
        _encoder_layer_kernel, num_heads=num_heads, eps=eps,
        q_rows=(1 if cls_only else None), ffn_chunk=ffn_chunk)

    return pl.pallas_call(
        kernel,
        out_shape=jax.ShapeDtypeStruct((B, Q, H), jnp.bfloat16),
        grid=(B,),
        in_specs=[act_spec, mask_spec] + [w_spec] * len(weights),
        out_specs=pl.BlockSpec((1, Q, H), lambda b: (b, 0, 0)),
        scratch_shapes=[pltpu.VMEM((Q, H), jnp.bfloat16)],
        compiler_params=pltpu.CompilerParams(
            dimension_semantics=("parallel",),
            vmem_limit_bytes=_vmem_limit_bytes()),
        cost_estimate=pl.CostEstimate(
            flops=flops, transcendentals=transcend, bytes_accessed=bytes_accessed),
    )(hidden, mask_add, *weights)


# ----------------------------------------------------------------------------
# Fused pooler (tanh) + dropout (identity) + classifier head (one kernel)
# ----------------------------------------------------------------------------
def _pooler_head_kernel(cls_ref, pw_ref, pb_ref,
                        c1w_ref, c1b_ref, g1_ref, b1_ref,
                        c2w_ref, c2b_ref, g2_ref, b2_ref,
                        c3w_ref, c3b_ref, out_ref, *, eps):
    x = cls_ref[...]                                      # (B, H) bf16
    pooled = jnp.tanh(jnp.dot(x, pw_ref[...],
                              preferred_element_type=jnp.float32) + pb_ref[...])
    # dropout1 / head dropouts are identity at inference
    h = jnp.dot(pooled.astype(jnp.bfloat16), c1w_ref[...],
                preferred_element_type=jnp.float32) + c1b_ref[...]
    h = jnp.maximum(_layernorm(h, g1_ref[...], b1_ref[...], eps), 0.0)
    h = jnp.dot(h.astype(jnp.bfloat16), c2w_ref[...],
                preferred_element_type=jnp.float32) + c2b_ref[...]
    h = jnp.maximum(_layernorm(h, g2_ref[...], b2_ref[...], eps), 0.0)
    logits = jnp.dot(h.astype(jnp.bfloat16), c3w_ref[...],
                     preferred_element_type=jnp.float32) + c3b_ref[...]
    out_ref[...] = logits.astype(out_ref.dtype)           # (B, 128) lane-dense


def pooler_classifier_head(cls, p, *, eps=LN_EPS):
    B, H = cls.shape
    args = (cls, p["pool_w"], p["pool_b"],
            p["c1_w"], p["c1_b"], p["cln1_g"], p["cln1_b"],
            p["c2_w"], p["c2_b"], p["cln2_g"], p["cln2_b"],
            p["c3_w"], p["c3_b"])
    out_lanes = p["c3_w"].shape[1]
    flops = 2 * B * (H * H + H * (H // 2) + (H // 2) * (H // 4) + (H // 4) * out_lanes)
    bytes_accessed = (sum(int(a.size) * a.dtype.itemsize for a in args)
                      + B * out_lanes * 4)
    return pl.pallas_call(
        functools.partial(_pooler_head_kernel, eps=eps),
        out_shape=jax.ShapeDtypeStruct((B, out_lanes), jnp.float32),
        in_specs=[pl.BlockSpec(memory_space=pltpu.MemorySpace.VMEM)] * len(args),
        out_specs=pl.BlockSpec(memory_space=pltpu.MemorySpace.VMEM),
        cost_estimate=pl.CostEstimate(
            flops=flops, transcendentals=B * H, bytes_accessed=bytes_accessed),
    )(*args)


# ----------------------------------------------------------------------------
# Forward pass (embedding gathers are XLA glue; everything else is Pallas)
# ----------------------------------------------------------------------------
def graphcodebert_classifier_forward(params, input_ids, attention_mask):
    cfg = params["cfg"]
    B, S = input_ids.shape
    H, nH = cfg["hidden"], cfg["num_heads"]
    pad_id = cfg["pad_token_id"]

    # HF RoBERTa create_position_ids_from_input_ids: derive from padding token
    pad_mask = (input_ids != pad_id).astype(jnp.int32)
    pos_ids = (jnp.cumsum(pad_mask, axis=1) * pad_mask + pad_id).astype(jnp.int32)
    emb = (params["word_emb"][input_ids]
           + params["pos_emb"][pos_ids]
           + params["type_emb"][0][None, None, :]).astype(jnp.float32)
    hidden = layernorm(emb.reshape(B * S, H),
                       params["emb_ln_g"], params["emb_ln_b"])
    hidden = hidden.reshape(B, S, H)                      # bf16 activations

    # additive attention mask, (B, 1, S)
    mask_add = ((1.0 - attention_mask.astype(jnp.float32)) * -1e9).reshape(B, 1, S)

    # --- transformer encoder: one fused Pallas kernel per layer ---
    layers = params["layers"]
    for lp in layers[:-1]:
        hidden = encoder_layer(hidden, mask_add, lp, num_heads=nH)
    # last layer: only the CLS row feeds the pooler -> compute row 0 only
    hidden_cls = encoder_layer(hidden, mask_add, layers[-1],
                               num_heads=nH, cls_only=True)   # (B, 1, H)

    # --- pooler + classifier head (single fused kernel) ---
    cls = hidden_cls[:, 0, :]
    logits_padded = pooler_classifier_head(cls, params)
    return logits_padded[:, :cfg["num_labels"]]


# ----------------------------------------------------------------------------
# Deterministic parameter init (synthetic; no checkpoint loading)
# ----------------------------------------------------------------------------
def init_params(key, *, vocab=100, hidden=32, num_heads=2, num_layers=2,
                intermediate=64, max_pos=16, num_labels=2):
    keys = iter(jax.random.split(key, 64 + 16 * num_layers))
    bf = jnp.bfloat16

    def nrm(shape, std, dtype=jnp.float32):
        return (std * jax.random.normal(next(keys), shape, jnp.float32)).astype(dtype)

    H, I = hidden, intermediate
    # pad the final classifier weight to 128 output lanes for lane-dense stores
    c3_w = jnp.pad(nrm((H // 4, num_labels), 0.01),
                   ((0, 0), (0, 128 - num_labels))).astype(bf)

    params = {
        "cfg": {"hidden": H, "num_heads": num_heads, "num_layers": num_layers,
                "num_labels": num_labels, "pad_token_id": 1},
        "word_emb": nrm((vocab, H), 0.02),
        "pos_emb": nrm((max_pos, H), 0.02),
        "type_emb": nrm((1, H), 0.02),
        "emb_ln_g": jnp.ones((1, H), jnp.float32),
        "emb_ln_b": jnp.zeros((1, H), jnp.float32),
        "pool_w": nrm((H, H), 0.02, bf),
        "pool_b": jnp.zeros((1, H), jnp.float32),
        # classifier head (PyTorch _init_weights: normal std=0.01, zero bias)
        "c1_w": nrm((H, H // 2), 0.01, bf),
        "c1_b": jnp.zeros((1, H // 2), jnp.float32),
        "cln1_g": jnp.ones((1, H // 2), jnp.float32),
        "cln1_b": jnp.zeros((1, H // 2), jnp.float32),
        "c2_w": nrm((H // 2, H // 4), 0.01, bf),
        "c2_b": jnp.zeros((1, H // 4), jnp.float32),
        "cln2_g": jnp.ones((1, H // 4), jnp.float32),
        "cln2_b": jnp.zeros((1, H // 4), jnp.float32),
        "c3_w": c3_w,
        "c3_b": jnp.zeros((1, 128), jnp.float32),
        "layers": [],
    }
    for _ in range(num_layers):
        qkv_w = jnp.concatenate(
            [nrm((H, H), 0.02), nrm((H, H), 0.02), nrm((H, H), 0.02)],
            axis=1).astype(bf)                       # fused (H, 3H) QKV weight
        lp = {
            "qkv_w": qkv_w,
            "qkv_b": jnp.zeros((1, 3 * H), jnp.float32),
            "o_w": nrm((H, H), 0.02, bf),
            "o_b": jnp.zeros((1, H), jnp.float32),
            "attn_ln_g": jnp.ones((1, H), jnp.float32),
            "attn_ln_b": jnp.zeros((1, H), jnp.float32),
            "f1_w": nrm((H, I), 0.02, bf),
            "f1_b": jnp.zeros((1, I), jnp.float32),
            "f2_w": nrm((I, H), 0.02, bf),
            "f2_b": jnp.zeros((1, H), jnp.float32),
            "ffn_ln_g": jnp.ones((1, H), jnp.float32),
            "ffn_ln_b": jnp.zeros((1, H), jnp.float32),
        }
        params["layers"].append(lp)
    return params


# ----------------------------------------------------------------------------
if __name__ == "__main__":
    key = jax.random.PRNGKey(0)
    pkey, dkey = jax.random.split(key)

    B, S = 2, 8          # batch, sequence length (scaled down from 8 / 512)
    VOCAB, H = 100, 32   # hidden scaled down from 768; 2 heads; 2 layers
    params = init_params(
        pkey, vocab=VOCAB, hidden=H, num_heads=2, num_layers=2,
        intermediate=2 * H, max_pos=S + 4, num_labels=2,
    )

    input_ids = jax.random.randint(dkey, (B, S), 0, VOCAB, dtype=jnp.int32)
    attention_mask = jnp.ones((B, S), dtype=jnp.int32)

    logits = graphcodebert_classifier_forward(params, input_ids, attention_mask)
    logits = jax.block_until_ready(logits)
    assert logits.shape == (B, 2) and logits.dtype == jnp.float32
    print("KERNEL_OK")
</pallas_src>

<mosaic_0001>
module attributes {stable_mosaic.version = 11 : i64} {
  func.func @_layernorm_kernel(%arg0: i32, %arg1: memref<16x32xf32, #tpu.memory_space<vmem>>, %arg2: memref<1x32xf32, #tpu.memory_space<vmem>>, %arg3: memref<1x32xf32, #tpu.memory_space<vmem>>, %arg4: memref<16x32xbf16, #tpu.memory_space<vmem>>) attributes {dimension_semantics = [#tpu.dimension_semantics<parallel>], iteration_bounds = array<i64: 1>, scalar_prefetch = 0 : i64, scratch_operands = 0 : i64, tpu.core_type = #tpu.core_type<tc>, window_params = [{transform_indices = @transform_0, window_bounds = array<i64: 16, 32>}, {pipeline_mode = #tpu.pipeline_mode<synchronous>, transform_indices = @transform_1, window_bounds = array<i64: 1, 32>}, {pipeline_mode = #tpu.pipeline_mode<synchronous>, transform_indices = @transform_2, window_bounds = array<i64: 1, 32>}, {transform_indices = @transform_3, window_bounds = array<i64: 16, 32>}]} {
    %c0 = arith.constant 0 : index
    %c0_0 = arith.constant 0 : index
    %0 = vector.load %arg1[%c0, %c0_0] : memref<16x32xf32, #tpu.memory_space<vmem>>, vector<16x32xf32>
    %c0_1 = arith.constant 0 : index
    %c0_2 = arith.constant 0 : index
    %1 = vector.load %arg2[%c0_1, %c0_2] : memref<1x32xf32, #tpu.memory_space<vmem>>, vector<1x32xf32>
    %c0_3 = arith.constant 0 : index
    %c0_4 = arith.constant 0 : index
    %2 = vector.load %arg3[%c0_3, %c0_4] : memref<1x32xf32, #tpu.memory_space<vmem>>, vector<1x32xf32>
    %cst = arith.constant dense<0.000000e+00> : vector<16xf32>
    %3 = vector.multi_reduction <add>, %0, %cst [1] : vector<16x32xf32> to vector<16xf32>
    %4 = vector.shape_cast %3 : vector<16xf32> to vector<16x1xf32>
    %cst_5 = arith.constant 3.200000e+01 : f32
    %5 = vector.broadcast %cst_5 : f32 to vector<16x1xf32>
    %6 = arith.divf %4, %5 : vector<16x1xf32>
    %7 = vector.broadcast %6 : vector<16x1xf32> to vector<16x32xf32>
    %8 = arith.subf %0, %7 : vector<16x32xf32>
    %9 = arith.mulf %8, %8 : vector<16x32xf32>
    %cst_6 = arith.constant dense<0.000000e+00> : vector<16xf32>
    %10 = vector.multi_reduction <add>, %9, %cst_6 [1] : vector<16x32xf32> to vector<16xf32>
    %11 = vector.shape_cast %10 : vector<16xf32> to vector<16x1xf32>
    %cst_7 = arith.constant 3.200000e+01 : f32
    %12 = vector.broadcast %cst_7 : f32 to vector<16x1xf32>
    %13 = arith.divf %11, %12 : vector<16x1xf32>
    %14 = vector.broadcast %6 : vector<16x1xf32> to vector<16x32xf32>
    %15 = arith.subf %0, %14 : vector<16x32xf32>
    %cst_8 = arith.constant 9.99999974E-6 : f32
    %16 = vector.broadcast %cst_8 : f32 to vector<16x1xf32>
    %17 = arith.addf %13, %16 : vector<16x1xf32>
    %18 = math.rsqrt %17 : vector<16x1xf32>
    %19 = vector.broadcast %18 : vector<16x1xf32> to vector<16x32xf32>
    %20 = arith.mulf %15, %19 : vector<16x32xf32>
    %21 = vector.broadcast %1 : vector<1x32xf32> to vector<16x32xf32>
    %22 = arith.mulf %20, %21 : vector<16x32xf32>
    %23 = vector.broadcast %2 : vector<1x32xf32> to vector<16x32xf32>
    %24 = arith.addf %22, %23 : vector<16x32xf32>
    %25 = arith.truncf %24 : vector<16x32xf32> to vector<16x32xbf16>
    %c0_9 = arith.constant 0 : index
    %c0_10 = arith.constant 0 : index
    %26 = vector.load %arg4[%c0_9, %c0_10] : memref<16x32xbf16, #tpu.memory_space<vmem>>, vector<16x32xbf16>
    tpu.vector_store %arg4[%c0_9, %c0_10], %25 {strides = array<i32>} : memref<16x32xbf16, #tpu.memory_space<vmem>>, vector<16x32xbf16>,
    return
  }
  func.func @transform_0(%arg0: i32) -> (i32, i32) {
    %c0_i32 = arith.constant 0 : i32
    %c0_i32_0 = arith.constant 0 : i32
    return %arg0, %c0_i32 : i32, i32
  }
  func.func @transform_1(%arg0: i32) -> (i32, i32) {
    %c0_i32 = arith.constant 0 : i32
    %c0_i32_0 = arith.constant 0 : i32
    %c0_i32_1 = arith.constant 0 : i32
    return %c0_i32, %c0_i32_0 : i32, i32
  }
  func.func @transform_2(%arg0: i32) -> (i32, i32) {
    %c0_i32 = arith.constant 0 : i32
    %c0_i32_0 = arith.constant 0 : i32
    %c0_i32_1 = arith.constant 0 : i32
    return %c0_i32, %c0_i32_0 : i32, i32
  }
  func.func @transform_3(%arg0: i32) -> (i32, i32) {
    %c0_i32 = arith.constant 0 : i32
    %c0_i32_0 = arith.constant 0 : i32
    return %arg0, %c0_i32 : i32, i32
  }
}

</mosaic_0001>

<llo_original>
// kernel: tpu_custom_call.1
$region0: #{tpu_custom_call.1}
  #allocation0 [shape = 'u32[]', space=smem, size = 0x4, offset = 0x4, fixed_abs, tag = 'smem constant byte address 0x4 - core index']
  #allocation1 [shape = 'u32[72,128]{1,0:T(1,128)}', space=vmem, size = 0x9000, scoped, tag = 'internal scratch']
  %s0 = inlined_call_operand.hbm [shape: f32[16,32], index: 0, kind: input, shape index: {}]
  %s1 = inlined_call_operand.hbm [shape: f32[1,32], index: 1, kind: input, shape index: {}]
  %s2 = inlined_call_operand.vmem [shape: f32[1,32], index: 2, kind: input, shape index: {}]
  %s3 = inlined_call_operand.hbm [shape: bf16[16,32], index: 3, kind: output, shape index: {}]
  %s4 = sld [smem:[#allocation0]]
  $region30: #{tpu_custom_call.1} parent=0
    _
  %s6 = ssub.s32 1, %s4
  %s7 = scalar_select 0, %s6, %s4
  $region1: #{tpu_custom_call.1} parent=0
    #allocation2 [shape = 'u8[8192]{0}', space=vmem, size = 0x2000, scoped, tag = 'input window, operand 0, single buffered']
    #allocation3 [shape = 's32[1]{0}', space=sflag, size = 0x4, scoped, tag = 'scoped memory for tpu_custom_call.1']
    #allocation4 [shape = 's32[1]{0}', space=sflag, size = 0x4, scoped, tag = 'scoped memory for tpu_custom_call.1']
    #allocation5 [shape = 'u8[512]{0}', space=vmem, size = 0x400, scoped, tag = 'input window, operand 1, single buffered']
    #allocation6 [shape = 's32[1]{0}', space=sflag, size = 0x4, scoped, tag = 'scoped memory for tpu_custom_call.1']
    #allocation7 [shape = 'u8[4096]{0}', space=vmem, size = 0x1000, scoped, tag = 'output window, operand 0, single buffered']
    %8 = vsyncpa [#allocation3], 0
    %9 = vsyncpa [#allocation6], 0
    %10 = vsyncpa [#allocation4], 0
    // Predicated region
    $region2: #{tpu_custom_call.1} parent=1 // pred_check
      _
    $region3: #{tpu_custom_call.1} parent=1 // pred_check_branch
      %12 = sbr.rel (0) target = $region5
    $region4: #{tpu_custom_call.1} parent=1 // pred_region
      %14 = vsyncadd [#allocation3], 0
      %s15 = sshll.u32 %s0, 4
      %s16 = int_to_ptr.hbm [resolvable:$true] %s15
      %s17 = sshll.u32 [#allocation2], 4
      %s18 = int_to_ptr.vmem [resolvable:$true] %s17
      %23 = dma.hbm_to_vmem [thread:$0]  %s16, 256, %s18, [#allocation3], 128, 128, 8
    $region5: #{tpu_custom_call.1} parent=1 // pred_fallthru
      _
    // Predicated region
    $region6: #{tpu_custom_call.1} parent=1 // pred_check
      _
    $region7: #{tpu_custom_call.1} parent=1 // pred_check_branch
      %25 = sbr.rel (0) target = $region9
    $region8: #{tpu_custom_call.1} parent=1 // pred_region
      %27 = vsyncadd [#allocation6], 0
      %s29 = sshll.u32 %s1, 4
      %s30 = int_to_ptr.hbm [resolvable:$true] %s29
      %s31 = sshll.u32 [#allocation5], 4
      %s32 = int_to_ptr.vmem [resolvable:$true] %s31
      %34 = dma.hbm_to_vmem [thread:$0]  %s30, 16, %s32, [#allocation6]
    $region9: #{tpu_custom_call.1} parent=1 // pred_fallthru
      _
    // Predicated region
    $region10: #{tpu_custom_call.1} parent=1 // pred_check
      _
    $region11: #{tpu_custom_call.1} parent=1 // pred_check_branch
      %36 = sbr.rel (0) target = $region13
    $region12: #{tpu_custom_call.1} parent=1 // pred_region
      _
    $region13: #{tpu_custom_call.1} parent=1 // pred_fallthru
      _
    // Predicated region
    $region14: #{tpu_custom_call.1} parent=1 // pred_check
      _
    $region15: #{tpu_custom_call.1} parent=1 // pred_check_branch
      %38 = sbr.rel (0) target = $region17
    $region16: #{tpu_custom_call.1} parent=1 // pred_region
      %40 = dma.done [#allocation3], 256
    $region17: #{tpu_custom_call.1} parent=1 // pred_fallthru
      _
    // Predicated region
    $region18: #{tpu_custom_call.1} parent=1 // pred_check
      _
    $region19: #{tpu_custom_call.1} parent=1 // pred_check_branch
      %42 = sbr.rel (0) target = $region21
    $region20: #{tpu_custom_call.1} parent=1 // pred_region
      %44 = dma.done [#allocation6], 16
    $region21: #{tpu_custom_call.1} parent=1 // pred_fallthru
      _
    %v45 = vld [vmem:[#allocation2] sm:$0xff]
    %v46 = vld [vmem:[#allocation2 + $0x8] sm:$0xff]
    %v47 = vld [vmem:[#allocation5] sm:$0x1]
    %v48 = vld [vmem:[%s2] sm:$0x1]
    %vm49 = vcmask 261120
    %v50 = vsel %vm49, %v45, 0.0
    %51 = vadd.xlane.f32.xlu0 %v50
    %v52 = vpop.xlane.xlu0 %51
    %v53 = vsel %vm49, %v46, 0.0
    %54 = vadd.xlane.f32.xlu0 %v53
    %v55 = vpop.xlane.xlu0 %54
    %v56 = vrcp.pop 32.0
    %v57 = vmul.f32 32.0, %v56
    %v58 = vsub.f32 1.0, %v57
    %v59 = vmul.f32 %v56, %v58
    %v60 = vadd.f32 %v56, %v59
    %vm61 = vweird.f32 %v56
    %v62 = vsel %vm61, %v56, %v60
    %v63 = vmul.f32 %v52, %v62
    %v64 = vmul.f32 %v55, %v62
    %v65 = vsub.f32 %v45, %v63
    %v66 = vsub.f32 %v46, %v64
    %v67 = vmul.f32 %v65, %v65
    %v68 = vmul.f32 %v66, %v66
    %v69 = vsel %vm49, %v67, 0.0
    %70 = vadd.xlane.f32.xlu0 %v69
    %v71 = vpop.xlane.xlu0 %70
    %v72 = vsel %vm49, %v68, 0.0
    %73 = vadd.xlane.f32.xlu0 %v72
    %v74 = vpop.xlane.xlu0 %73
    %v75 = vmul.f32 %v71, %v62
    %v76 = vmul.f32 %v74, %v62
    %v77 = vadd.f32 %v75, 1e-05
    %v78 = vadd.f32 %v76, 1e-05
    %v79 = vrsqrt.pop %v77
    %v80 = vmul.f32 %v79, %v77
    %v81 = vmul.f32 %v80, %v79
    %v82 = vmul.f32 0.5, %v81
    %v83 = vsub.f32 1.5, %v82
    %v84 = vmul.f32 %v79, %v83
    %vm85 = vweird.f32 %v77
    %vm86 = vweird.f32 %v79
    %vm87 = vmor %vm85, %vm86
    %v88 = vsel %vm87, %v79, %v84
    %v89 = vrsqrt.pop %v78
    %v90 = vmul.f32 %v89, %v78
    %v91 = vmul.f32 %v90, %v89
    %v92 = vmul.f32 0.5, %v91
    %v93 = vsub.f32 1.5, %v92
    %v94 = vmul.f32 %v89, %v93
    %vm95 = vweird.f32 %v78
    %vm96 = vweird.f32 %v89
    %vm97 = vmor %vm95, %vm96
    %v98 = vsel %vm97, %v89, %v94
    %v99 = vmul.f32 %v65, %v88
    %v100 = vmul.f32 %v66, %v98
    %v102 = vperm.slane %v47, 0
    %v104 = vmul.f32 %v99, %v102
    %v105 = vmul.f32 %v100, %v102
    %v107 = vperm.slane %v48, 0
    %v109 = vadd.f32 %v104, %v107
    %v110 = vadd.f32 %v105, %v107
    %v111 = vpack.c.bf16 %v109, %v109
    %v112 = vpack.c.bf16 %v110, %v110
    %vm113 = vcmask 257024
    %114 = vst.msk [vmem:[#allocation7] sm:$0xf] %vm113, %v111
    %115 = vst.msk [vmem:[#allocation7 + $0x4] sm:$0xf] %vm113, %v112
    // Predicated region
    $region22: #{tpu_custom_call.1} parent=1 // pred_check
      _
    $region23: #{tpu_custom_call.1} parent=1 // pred_check_branch
      %117 = sbr.rel (0) target = $region25
    $region24: #{tpu_custom_call.1} parent=1 // pred_region
      %119 = vsyncadd [#allocation4], 0
      %s120 = sshll.u32 [#allocation7], 4
      %s121 = int_to_ptr.vmem [resolvable:$true] %s120
      %s122 = sshll.u32 %s3, 4
      %s123 = int_to_ptr.hbm [resolvable:$true] %s122
      %128 = dma.vmem_to_hbm [thread:$0]  %s121, 128, %s123, [#allocation4], 64, 64, 4
    $region25: #{tpu_custom_call.1} parent=1 // pred_fallthru
      _
    // Predicated region
    $region26: #{tpu_custom_call.1} parent=1 // pred_check
      _
    $region27: #{tpu_custom_call.1} parent=1 // pred_check_branch
      %130 = sbr.rel (0) target = $region29
    $region28: #{tpu_custom_call.1} parent=1 // pred_region
      %132 = dma.done [#allocation4], 128
    $region29: #{tpu_custom_call.1} parent=1 // pred_fallthru
      _
    %133 = vsyncpa [#allocation3], 1
    %134 = vsyncpa [#allocation6], 1
    %135 = vsyncpa [#allocation4], 1

</llo_original>
